<compile_context>
chip_gen: v7x
topology: tpu7x:2x2x1
jax: 0.10.0
libtpu: 0.0.40
codegen_flags: <defaults>
</compile_context>

<pallas_src>
import functools

import jax
import jax.numpy as jnp
from jax import lax
from jax.experimental import pallas as pl
from jax.experimental.pallas import tpu as pltpu


_VMEM = pl.BlockSpec(memory_space=pltpu.MemorySpace.VMEM)


# ------------------------------ fused Pallas kernel -------------------------

def fused_forward_kernel(pt_ref, cw_ref, cb_ref, w1_ref, b1_ref, hw_ref,
                         hb_ref, feat_t_ref, out_t_ref):
    """conv3x3 + ReLU + 2x2 maxpool + fc1 + ReLU + head, fully VMEM-resident.

    pt_ref     : (Cin*9, 4*N*S) bf16  transposed im2col patches; columns are
                 ordered (dh, dw, n, ho, wo) so pooling is a max over 4 blocks.
    cw_ref     : (Cout, Cin*9)  bf16  conv weight (OIHW flattened per row).
    cb_ref     : (Cout, 1)      f32   conv bias.
    w1_ref     : (Cout, hidden, S) f32  fc1 weight, w1[c, j, s] = fc1_w[j, c*S+s].
    b1_ref     : (hidden, 1)    f32   fc1 bias.
    hw_ref     : (classes, hidden) f32  head weight (torch layout, no transpose).
    hb_ref     : (classes, 1)   f32   head bias.
    feat_t_ref : (hidden, N)    f32   output: feature, transposed.
    out_t_ref  : (classes, N)   f32   output: logits, transposed.
    """
    cout, hidden, s = w1_ref.shape
    ns = pt_ref.shape[1] // 4          # N * Ho * Wo
    n_batch = ns // s

    # --- conv + bias + ReLU: one MXU matmul, spatial axis lane-dense (512). --
    conv = jnp.dot(cw_ref[...], pt_ref[...],
                   preferred_element_type=jnp.float32)            # (Cout, 4*N*S)
    conv = jnp.maximum(conv + cb_ref[...], 0.0)

    # --- 2x2 max-pool: elementwise max of the four (dh, dw) column blocks. ---
    pooled = jnp.maximum(
        jnp.maximum(conv[:, 0 * ns:1 * ns], conv[:, 1 * ns:2 * ns]),
        jnp.maximum(conv[:, 2 * ns:3 * ns], conv[:, 3 * ns:4 * ns]))  # (Cout, N*S)

    # --- fc1 + ReLU per sample: VPU multiply/reduce (tiny, keeps f32). -------
    for n in range(n_batch):                       # static unroll (small batch)
        p_n = pooled[:, n * s:(n + 1) * s]         # (Cout, S)
        acc = p_n[0:1, :] * w1_ref[0]              # (hidden, S)
        for c in range(1, cout):
            acc = acc + p_n[c:c + 1, :] * w1_ref[c]
        feat = jnp.sum(acc, axis=1, keepdims=True) + b1_ref[...]   # (hidden, 1)
        feat_t_ref[:, n:n + 1] = jnp.maximum(feat, 0.0)

    # --- head: tiny f32 MXU matmul on the freshly written feature block. -----
    out_t_ref[...] = (jnp.dot(hw_ref[...], feat_t_ref[...],
                              preferred_element_type=jnp.float32)
                      + hb_ref[...])


# ------------------------------ wrapper glue --------------------------------

def build_patches_t(x, ksize=3, pad=1):
    """NCHW input -> (Cin*k*k, 4*N*Ho*Wo) transposed im2col patches.

    Row order (cin, kh, kw) matches conv_w.reshape(Cout, -1); column order is
    (dh, dw, n, ho, wo) so each 2x2 pool window lands in 4 contiguous blocks.
    """
    n, c, h, w = x.shape
    ho, wo = h // 2, w // 2
    xp = jnp.pad(x, ((0, 0), (0, 0), (pad, pad), (pad, pad)))
    taps = [xp[:, :, kh:kh + h, kw:kw + w]
            for kh in range(ksize) for kw in range(ksize)]    # each (N, C, H, W)
    t = jnp.stack(taps, axis=0)                               # (k*k, N, C, H, W)
    t = t.reshape(ksize * ksize, n, c, ho, 2, wo, 2)          # h->(ho,dh), w->(wo,dw)
    t = t.transpose(2, 0, 4, 6, 1, 3, 5)                      # (C, k*k, dh, dw, N, ho, wo)
    return t.reshape(c * ksize * ksize, 4 * n * ho * wo)


def prepare_params(params):
    """One-time re-layout of torch-style weights into kernel-ready form."""
    conv_w, conv_b = params["conv_w"], params["conv_b"]
    fc1_w, fc1_b = params["fc1_w"], params["fc1_b"]
    head_w, head_b = params["head_w"], params["head_b"]
    cout = conv_w.shape[0]
    hidden, flat_in = fc1_w.shape
    s = flat_in // cout                                       # Ho * Wo
    return {
        "cw": conv_w.reshape(cout, -1).astype(jnp.bfloat16),
        "cb": conv_b.reshape(cout, 1).astype(jnp.float32),
        # w1[c, j, s] = fc1_w[j, c*S + s]  (torch NCHW flatten order)
        "w1": fc1_w.reshape(hidden, cout, s).transpose(1, 0, 2).astype(jnp.float32),
        "b1": fc1_b.reshape(hidden, 1).astype(jnp.float32),
        "hw": head_w.astype(jnp.float32),
        "hb": head_b.reshape(-1, 1).astype(jnp.float32),
    }


def base_head_split_forward(prepped, x, algorithm):
    """Pallas implementation of BaseHeadSplit.forward (one fused kernel)."""
    n = x.shape[0]
    hidden = prepped["b1"].shape[0]
    classes = prepped["hb"].shape[0]

    # im2col stays in the wrapper (72 KiB of patches): it lets the kernel do
    # the whole conv as a single lane-dense MXU matmul with no in-kernel
    # relayouts. Operands cast to bf16; accumulation is f32 inside the kernel.
    patches_t = build_patches_t(x).astype(jnp.bfloat16)

    feat_t, out_t = pl.pallas_call(
        fused_forward_kernel,
        out_shape=(jax.ShapeDtypeStruct((hidden, n), jnp.float32),
                   jax.ShapeDtypeStruct((classes, n), jnp.float32)),
        in_specs=[_VMEM] * 7,
        out_specs=(_VMEM, _VMEM),
    )(patches_t, prepped["cw"], prepped["cb"], prepped["w1"], prepped["b1"],
      prepped["hw"], prepped["hb"])

    feature_2 = feat_t.T                                      # (N, hidden)
    out = out_t.T                                             # (N, classes)
    if algorithm == "PFAKD":
        return feature_2, out
    return out


# ------------------------------ reference (plain JAX) -----------------------

def reference_forward(params, x, algorithm):
    conv_w, conv_b = params["conv_w"], params["conv_b"]
    fc1_w, fc1_b = params["fc1_w"], params["fc1_b"]
    head_w, head_b = params["head_w"], params["head_b"]
    conv = lax.conv_general_dilated(
        x, conv_w, (1, 1), ((1, 1), (1, 1)),
        dimension_numbers=("NCHW", "OIHW", "NCHW"))
    conv = jax.nn.relu(conv + conv_b[None, :, None, None])
    pooled = lax.reduce_window(conv, -jnp.inf, lax.max,
                               (1, 1, 2, 2), (1, 1, 2, 2), "VALID")
    flat = pooled.reshape(x.shape[0], -1)
    feat = jax.nn.relu(flat @ fc1_w.T + fc1_b)
    out = feat @ head_w.T + head_b
    if algorithm == "PFAKD":
        return feat, out
    return out


# ----------------------------------- main -----------------------------------

def init_params(key, cin=4, cout=8, h=16, w=16, hidden=32, classes=10):
    ks = jax.random.split(key, 6)
    flat_in = cout * (h // 2) * (w // 2)

    def unif(k, shape, fan_in):
        bound = 1.0 / jnp.sqrt(float(fan_in))
        return jax.random.uniform(k, shape, jnp.float32, -bound, bound)

    return {
        "conv_w": unif(ks[0], (cout, cin, 3, 3), cin * 9),
        "conv_b": unif(ks[1], (cout,), cin * 9),
        "fc1_w": unif(ks[2], (hidden, flat_in), flat_in),
        "fc1_b": unif(ks[3], (hidden,), flat_in),
        "head_w": unif(ks[4], (classes, hidden), hidden),
        "head_b": unif(ks[5], (classes,), hidden),
    }


if __name__ == "__main__":
    key = jax.random.PRNGKey(0)
    pkey, xkey = jax.random.split(key)
    params = init_params(pkey)
    x = jax.random.normal(xkey, (2, 4, 16, 16), jnp.float32)   # NCHW, like torch

    algorithm = "PFAKD"
    prepped = prepare_params(params)            # one-time weight re-layout
    fwd = jax.jit(functools.partial(base_head_split_forward, algorithm=algorithm))
    feat, out = fwd(prepped, x)
    jax.block_until_ready((feat, out))

    feat_ref, out_ref = reference_forward(params, x, algorithm)
    assert feat.shape == (2, 32) and out.shape == (2, 10)
    # bf16 MXU operands for the conv (f32 accumulation) => ~few-e-3 error budget.
    assert jnp.allclose(feat, feat_ref, atol=1e-2, rtol=1e-2)
    assert jnp.allclose(out, out_ref, atol=1e-2, rtol=1e-2)

    print("KERNEL_OK")
</pallas_src>

<mosaic_0001>
module attributes {stable_mosaic.version = 11 : i64} {
  func.func @fused_forward_kernel(%arg0: memref<36x512xbf16, #tpu.memory_space<vmem>>, %arg1: memref<8x36xbf16, #tpu.memory_space<vmem>>, %arg2: memref<8x1xf32, #tpu.memory_space<vmem>>, %arg3: memref<8x32x64xf32, #tpu.memory_space<vmem>>, %arg4: memref<32x1xf32, #tpu.memory_space<vmem>>, %arg5: memref<10x32xf32, #tpu.memory_space<vmem>>, %arg6: memref<10x1xf32, #tpu.memory_space<vmem>>, %arg7: memref<32x2xf32, #tpu.memory_space<vmem>>, %arg8: memref<10x2xf32, #tpu.memory_space<vmem>>) attributes {dimension_semantics = [], scalar_prefetch = 0 : i64, scratch_operands = 0 : i64, tpu.core_type = #tpu.core_type<tc>} {
    %c0 = arith.constant 0 : index
    %c0_0 = arith.constant 0 : index
    %0 = vector.load %arg1[%c0, %c0_0] : memref<8x36xbf16, #tpu.memory_space<vmem>>, vector<8x36xbf16>
    %c0_1 = arith.constant 0 : index
    %c0_2 = arith.constant 0 : index
    %1 = vector.load %arg0[%c0_1, %c0_2] : memref<36x512xbf16, #tpu.memory_space<vmem>>, vector<36x512xbf16>
    %cst = arith.constant dense<0.000000e+00> : vector<8x512xf32>
    %2 = tpu.matmul %0, %1, %cst {dimension_numbers = #tpu.dot_dimension_numbers<[1], [0], [0], [1], [0, 0, 1, 1], [], []>} : vector<8x36xbf16>, vector<36x512xbf16>, vector<8x512xf32> -> vector<8x512xf32>
    %c0_3 = arith.constant 0 : index
    %c0_4 = arith.constant 0 : index
    %3 = vector.load %arg2[%c0_3, %c0_4] : memref<8x1xf32, #tpu.memory_space<vmem>>, vector<8x1xf32>
    %4 = vector.broadcast %3 : vector<8x1xf32> to vector<8x512xf32>
    %5 = arith.addf %2, %4 : vector<8x512xf32>
    %cst_5 = arith.constant 0.000000e+00 : f32
    %6 = vector.broadcast %cst_5 : f32 to vector<8x512xf32>
    %7 = arith.maximumf %5, %6 : vector<8x512xf32>
    %8 = vector.extract_strided_slice %7 {offsets = [0, 0], sizes = [8, 128], strides = [1, 1]} : vector<8x512xf32> to vector<8x128xf32>
    %9 = vector.extract_strided_slice %7 {offsets = [0, 128], sizes = [8, 128], strides = [1, 1]} : vector<8x512xf32> to vector<8x128xf32>
    %10 = arith.maximumf %8, %9 : vector<8x128xf32>
    %11 = vector.extract_strided_slice %7 {offsets = [0, 256], sizes = [8, 128], strides = [1, 1]} : vector<8x512xf32> to vector<8x128xf32>
    %12 = vector.extract_strided_slice %7 {offsets = [0, 384], sizes = [8, 128], strides = [1, 1]} : vector<8x512xf32> to vector<8x128xf32>
    %13 = arith.maximumf %11, %12 : vector<8x128xf32>
    %14 = arith.maximumf %10, %13 : vector<8x128xf32>
    %15 = vector.extract_strided_slice %14 {offsets = [0, 0], sizes = [8, 64], strides = [1, 1]} : vector<8x128xf32> to vector<8x64xf32>
    %16 = vector.extract_strided_slice %15 {offsets = [0, 0], sizes = [1, 64], strides = [1, 1]} : vector<8x64xf32> to vector<1x64xf32>
    %c0_6 = arith.constant 0 : index
    %c0_7 = arith.constant 0 : index
    %c0_8 = arith.constant 0 : index
    %17 = vector.load %arg3[%c0_6, %c0_7, %c0_8] : memref<8x32x64xf32, #tpu.memory_space<vmem>>, vector<1x32x64xf32>
    %18 = vector.shape_cast %17 : vector<1x32x64xf32> to vector<32x64xf32>
    %19 = vector.broadcast %16 : vector<1x64xf32> to vector<32x64xf32>
    %20 = arith.mulf %19, %18 : vector<32x64xf32>
    %21 = vector.extract_strided_slice %15 {offsets = [1, 0], sizes = [1, 64], strides = [1, 1]} : vector<8x64xf32> to vector<1x64xf32>
    %c1 = arith.constant 1 : index
    %c0_9 = arith.constant 0 : index
    %c0_10 = arith.constant 0 : index
    %22 = vector.load %arg3[%c1, %c0_9, %c0_10] : memref<8x32x64xf32, #tpu.memory_space<vmem>>, vector<1x32x64xf32>
    %23 = vector.shape_cast %22 : vector<1x32x64xf32> to vector<32x64xf32>
    %24 = vector.broadcast %21 : vector<1x64xf32> to vector<32x64xf32>
    %25 = arith.mulf %24, %23 : vector<32x64xf32>
    %26 = arith.addf %20, %25 : vector<32x64xf32>
    %27 = vector.extract_strided_slice %15 {offsets = [2, 0], sizes = [1, 64], strides = [1, 1]} : vector<8x64xf32> to vector<1x64xf32>
    %c2 = arith.constant 2 : index
    %c0_11 = arith.constant 0 : index
    %c0_12 = arith.constant 0 : index
    %28 = vector.load %arg3[%c2, %c0_11, %c0_12] : memref<8x32x64xf32, #tpu.memory_space<vmem>>, vector<1x32x64xf32>
    %29 = vector.shape_cast %28 : vector<1x32x64xf32> to vector<32x64xf32>
    %30 = vector.broadcast %27 : vector<1x64xf32> to vector<32x64xf32>
    %31 = arith.mulf %30, %29 : vector<32x64xf32>
    %32 = arith.addf %26, %31 : vector<32x64xf32>
    %33 = vector.extract_strided_slice %15 {offsets = [3, 0], sizes = [1, 64], strides = [1, 1]} : vector<8x64xf32> to vector<1x64xf32>
    %c3 = arith.constant 3 : index
    %c0_13 = arith.constant 0 : index
    %c0_14 = arith.constant 0 : index
    %34 = vector.load %arg3[%c3, %c0_13, %c0_14] : memref<8x32x64xf32, #tpu.memory_space<vmem>>, vector<1x32x64xf32>
    %35 = vector.shape_cast %34 : vector<1x32x64xf32> to vector<32x64xf32>
    %36 = vector.broadcast %33 : vector<1x64xf32> to vector<32x64xf32>
    %37 = arith.mulf %36, %35 : vector<32x64xf32>
    %38 = arith.addf %32, %37 : vector<32x64xf32>
    %39 = vector.extract_strided_slice %15 {offsets = [4, 0], sizes = [1, 64], strides = [1, 1]} : vector<8x64xf32> to vector<1x64xf32>
    %c4 = arith.constant 4 : index
    %c0_15 = arith.constant 0 : index
    %c0_16 = arith.constant 0 : index
    %40 = vector.load %arg3[%c4, %c0_15, %c0_16] : memref<8x32x64xf32, #tpu.memory_space<vmem>>, vector<1x32x64xf32>
    %41 = vector.shape_cast %40 : vector<1x32x64xf32> to vector<32x64xf32>
    %42 = vector.broadcast %39 : vector<1x64xf32> to vector<32x64xf32>
    %43 = arith.mulf %42, %41 : vector<32x64xf32>
    %44 = arith.addf %38, %43 : vector<32x64xf32>
    %45 = vector.extract_strided_slice %15 {offsets = [5, 0], sizes = [1, 64], strides = [1, 1]} : vector<8x64xf32> to vector<1x64xf32>
    %c5 = arith.constant 5 : index
    %c0_17 = arith.constant 0 : index
    %c0_18 = arith.constant 0 : index
    %46 = vector.load %arg3[%c5, %c0_17, %c0_18] : memref<8x32x64xf32, #tpu.memory_space<vmem>>, vector<1x32x64xf32>
    %47 = vector.shape_cast %46 : vector<1x32x64xf32> to vector<32x64xf32>
    %48 = vector.broadcast %45 : vector<1x64xf32> to vector<32x64xf32>
    %49 = arith.mulf %48, %47 : vector<32x64xf32>
    %50 = arith.addf %44, %49 : vector<32x64xf32>
    %51 = vector.extract_strided_slice %15 {offsets = [6, 0], sizes = [1, 64], strides = [1, 1]} : vector<8x64xf32> to vector<1x64xf32>
    %c6 = arith.constant 6 : index
    %c0_19 = arith.constant 0 : index
    %c0_20 = arith.constant 0 : index
    %52 = vector.load %arg3[%c6, %c0_19, %c0_20] : memref<8x32x64xf32, #tpu.memory_space<vmem>>, vector<1x32x64xf32>
    %53 = vector.shape_cast %52 : vector<1x32x64xf32> to vector<32x64xf32>
    %54 = vector.broadcast %51 : vector<1x64xf32> to vector<32x64xf32>
    %55 = arith.mulf %54, %53 : vector<32x64xf32>
    %56 = arith.addf %50, %55 : vector<32x64xf32>
    %57 = vector.extract_strided_slice %15 {offsets = [7, 0], sizes = [1, 64], strides = [1, 1]} : vector<8x64xf32> to vector<1x64xf32>
    %c7 = arith.constant 7 : index
    %c0_21 = arith.constant 0 : index
    %c0_22 = arith.constant 0 : index
    %58 = vector.load %arg3[%c7, %c0_21, %c0_22] : memref<8x32x64xf32, #tpu.memory_space<vmem>>, vector<1x32x64xf32>
    %59 = vector.shape_cast %58 : vector<1x32x64xf32> to vector<32x64xf32>
    %60 = vector.broadcast %57 : vector<1x64xf32> to vector<32x64xf32>
    %61 = arith.mulf %60, %59 : vector<32x64xf32>
    %62 = arith.addf %56, %61 : vector<32x64xf32>
    %cst_23 = arith.constant dense<0.000000e+00> : vector<32xf32>
    %63 = vector.multi_reduction <add>, %62, %cst_23 [1] : vector<32x64xf32> to vector<32xf32>
    %64 = vector.shape_cast %63 : vector<32xf32> to vector<32x1xf32>
    %c0_24 = arith.constant 0 : index
    %c0_25 = arith.constant 0 : index
    %65 = vector.load %arg4[%c0_24, %c0_25] : memref<32x1xf32, #tpu.memory_space<vmem>>, vector<32x1xf32>
    %66 = arith.addf %64, %65 : vector<32x1xf32>
    %cst_26 = arith.constant 0.000000e+00 : f32
    %67 = vector.broadcast %cst_26 : f32 to vector<32x1xf32>
    %68 = arith.maximumf %66, %67 : vector<32x1xf32>
    %c0_27 = arith.constant 0 : index
    %c0_28 = arith.constant 0 : index
    %69 = vector.load %arg7[%c0_27, %c0_28] : memref<32x2xf32, #tpu.memory_space<vmem>>, vector<32x1xf32>
    tpu.vector_store %arg7[%c0_27, %c0_28], %68 {strides = array<i32>} : memref<32x2xf32, #tpu.memory_space<vmem>>, vector<32x1xf32>,
    %70 = vector.extract_strided_slice %14 {offsets = [0, 64], sizes = [8, 64], strides = [1, 1]} : vector<8x128xf32> to vector<8x64xf32>
    %71 = vector.extract_strided_slice %70 {offsets = [0, 0], sizes = [1, 64], strides = [1, 1]} : vector<8x64xf32> to vector<1x64xf32>
    %c0_29 = arith.constant 0 : index
    %c0_30 = arith.constant 0 : index
    %c0_31 = arith.constant 0 : index
    %72 = vector.load %arg3[%c0_29, %c0_30, %c0_31] : memref<8x32x64xf32, #tpu.memory_space<vmem>>, vector<1x32x64xf32>
    %73 = vector.shape_cast %72 : vector<1x32x64xf32> to vector<32x64xf32>
    %74 = vector.broadcast %71 : vector<1x64xf32> to vector<32x64xf32>
    %75 = arith.mulf %74, %73 : vector<32x64xf32>
    %76 = vector.extract_strided_slice %70 {offsets = [1, 0], sizes = [1, 64], strides = [1, 1]} : vector<8x64xf32> to vector<1x64xf32>
    %c1_32 = arith.constant 1 : index
    %c0_33 = arith.constant 0 : index
    %c0_34 = arith.constant 0 : index
    %77 = vector.load %arg3[%c1_32, %c0_33, %c0_34] : memref<8x32x64xf32, #tpu.memory_space<vmem>>, vector<1x32x64xf32>
    %78 = vector.shape_cast %77 : vector<1x32x64xf32> to vector<32x64xf32>
    %79 = vector.broadcast %76 : vector<1x64xf32> to vector<32x64xf32>
    %80 = arith.mulf %79, %78 : vector<32x64xf32>
    %81 = arith.addf %75, %80 : vector<32x64xf32>
    %82 = vector.extract_strided_slice %70 {offsets = [2, 0], sizes = [1, 64], strides = [1, 1]} : vector<8x64xf32> to vector<1x64xf32>
    %c2_35 = arith.constant 2 : index
    %c0_36 = arith.constant 0 : index
    %c0_37 = arith.constant 0 : index
    %83 = vector.load %arg3[%c2_35, %c0_36, %c0_37] : memref<8x32x64xf32, #tpu.memory_space<vmem>>, vector<1x32x64xf32>
    %84 = vector.shape_cast %83 : vector<1x32x64xf32> to vector<32x64xf32>
    %85 = vector.broadcast %82 : vector<1x64xf32> to vector<32x64xf32>
    %86 = arith.mulf %85, %84 : vector<32x64xf32>
    %87 = arith.addf %81, %86 : vector<32x64xf32>
    %88 = vector.extract_strided_slice %70 {offsets = [3, 0], sizes = [1, 64], strides = [1, 1]} : vector<8x64xf32> to vector<1x64xf32>
    %c3_38 = arith.constant 3 : index
    %c0_39 = arith.constant 0 : index
    %c0_40 = arith.constant 0 : index
    %89 = vector.load %arg3[%c3_38, %c0_39, %c0_40] : memref<8x32x64xf32, #tpu.memory_space<vmem>>, vector<1x32x64xf32>
    %90 = vector.shape_cast %89 : vector<1x32x64xf32> to vector<32x64xf32>
    %91 = vector.broadcast %88 : vector<1x64xf32> to vector<32x64xf32>
    %92 = arith.mulf %91, %90 : vector<32x64xf32>
    %93 = arith.addf %87, %92 : vector<32x64xf32>
    %94 = vector.extract_strided_slice %70 {offsets = [4, 0], sizes = [1, 64], strides = [1, 1]} : vector<8x64xf32> to vector<1x64xf32>
    %c4_41 = arith.constant 4 : index
    %c0_42 = arith.constant 0 : index
    %c0_43 = arith.constant 0 : index
    %95 = vector.load %arg3[%c4_41, %c0_42, %c0_43] : memref<8x32x64xf32, #tpu.memory_space<vmem>>, vector<1x32x64xf32>
    %96 = vector.shape_cast %95 : vector<1x32x64xf32> to vector<32x64xf32>
    %97 = vector.broadcast %94 : vector<1x64xf32> to vector<32x64xf32>
    %98 = arith.mulf %97, %96 : vector<32x64xf32>
    %99 = arith.addf %93, %98 : vector<32x64xf32>
    %100 = vector.extract_strided_slice %70 {offsets = [5, 0], sizes = [1, 64], strides = [1, 1]} : vector<8x64xf32> to vector<1x64xf32>
    %c5_44 = arith.constant 5 : index
    %c0_45 = arith.constant 0 : index
    %c0_46 = arith.constant 0 : index
    %101 = vector.load %arg3[%c5_44, %c0_45, %c0_46] : memref<8x32x64xf32, #tpu.memory_space<vmem>>, vector<1x32x64xf32>
    %102 = vector.shape_cast %101 : vector<1x32x64xf32> to vector<32x64xf32>
    %103 = vector.broadcast %100 : vector<1x64xf32> to vector<32x64xf32>
    %104 = arith.mulf %103, %102 : vector<32x64xf32>
    %105 = arith.addf %99, %104 : vector<32x64xf32>
    %106 = vector.extract_strided_slice %70 {offsets = [6, 0], sizes = [1, 64], strides = [1, 1]} : vector<8x64xf32> to vector<1x64xf32>
    %c6_47 = arith.constant 6 : index
    %c0_48 = arith.constant 0 : index
    %c0_49 = arith.constant 0 : index
    %107 = vector.load %arg3[%c6_47, %c0_48, %c0_49] : memref<8x32x64xf32, #tpu.memory_space<vmem>>, vector<1x32x64xf32>
    %108 = vector.shape_cast %107 : vector<1x32x64xf32> to vector<32x64xf32>
    %109 = vector.broadcast %106 : vector<1x64xf32> to vector<32x64xf32>
    %110 = arith.mulf %109, %108 : vector<32x64xf32>
    %111 = arith.addf %105, %110 : vector<32x64xf32>
    %112 = vector.extract_strided_slice %70 {offsets = [7, 0], sizes = [1, 64], strides = [1, 1]} : vector<8x64xf32> to vector<1x64xf32>
    %c7_50 = arith.constant 7 : index
    %c0_51 = arith.constant 0 : index
    %c0_52 = arith.constant 0 : index
    %113 = vector.load %arg3[%c7_50, %c0_51, %c0_52] : memref<8x32x64xf32, #tpu.memory_space<vmem>>, vector<1x32x64xf32>
    %114 = vector.shape_cast %113 : vector<1x32x64xf32> to vector<32x64xf32>
    %115 = vector.broadcast %112 : vector<1x64xf32> to vector<32x64xf32>
    %116 = arith.mulf %115, %114 : vector<32x64xf32>
    %117 = arith.addf %111, %116 : vector<32x64xf32>
    %cst_53 = arith.constant dense<0.000000e+00> : vector<32xf32>
    %118 = vector.multi_reduction <add>, %117, %cst_53 [1] : vector<32x64xf32> to vector<32xf32>
    %119 = vector.shape_cast %118 : vector<32xf32> to vector<32x1xf32>
    %c0_54 = arith.constant 0 : index
    %c0_55 = arith.constant 0 : index
    %120 = vector.load %arg4[%c0_54, %c0_55] : memref<32x1xf32, #tpu.memory_space<vmem>>, vector<32x1xf32>
    %121 = arith.addf %119, %120 : vector<32x1xf32>
    %cst_56 = arith.constant 0.000000e+00 : f32
    %122 = vector.broadcast %cst_56 : f32 to vector<32x1xf32>
    %123 = arith.maximumf %121, %122 : vector<32x1xf32>
    %c0_57 = arith.constant 0 : index
    %c1_58 = arith.constant 1 : index
    %124 = vector.load %arg7[%c0_57, %c1_58] : memref<32x2xf32, #tpu.memory_space<vmem>>, vector<32x1xf32>
    tpu.vector_store %arg7[%c0_57, %c1_58], %123 {strides = array<i32>} : memref<32x2xf32, #tpu.memory_space<vmem>>, vector<32x1xf32>,
    %c0_59 = arith.constant 0 : index
    %c0_60 = arith.constant 0 : index
    %125 = vector.load %arg5[%c0_59, %c0_60] : memref<10x32xf32, #tpu.memory_space<vmem>>, vector<10x32xf32>
    %c0_61 = arith.constant 0 : index
    %c0_62 = arith.constant 0 : index
    %126 = vector.load %arg7[%c0_61, %c0_62] : memref<32x2xf32, #tpu.memory_space<vmem>>, vector<32x2xf32>
    %cst_63 = arith.constant dense<0.000000e+00> : vector<10x2xf32>
    %127 = tpu.matmul %125, %126, %cst_63 {dimension_numbers = #tpu.dot_dimension_numbers<[1], [0], [0], [1], [0, 0, 1, 1], [], []>} : vector<10x32xf32>, vector<32x2xf32>, vector<10x2xf32> -> vector<10x2xf32>
    %c0_64 = arith.constant 0 : index
    %c0_65 = arith.constant 0 : index
    %128 = vector.load %arg6[%c0_64, %c0_65] : memref<10x1xf32, #tpu.memory_space<vmem>>, vector<10x1xf32>
    %129 = vector.broadcast %128 : vector<10x1xf32> to vector<10x2xf32>
    %130 = arith.addf %127, %129 : vector<10x2xf32>
    %c0_66 = arith.constant 0 : index
    %c0_67 = arith.constant 0 : index
    %131 = vector.load %arg8[%c0_66, %c0_67] : memref<10x2xf32, #tpu.memory_space<vmem>>, vector<10x2xf32>
    tpu.vector_store %arg8[%c0_66, %c0_67], %130 {strides = array<i32>} : memref<10x2xf32, #tpu.memory_space<vmem>>, vector<10x2xf32>,
    return
  }
}

</mosaic_0001>

<llo_original>
// kernel: base_head_split_forward.1
$region0: #{base_head_split_forward.1}
  #allocation0 [shape = 'u32[]', space=smem, size = 0x4, offset = 0x4, fixed_abs, tag = 'smem constant byte address 0x4 - core index']
  #allocation1 [shape = 'u32[144,128]{1,0:T(1,128)}', space=vmem, size = 0x12000, scoped, tag = 'internal scratch']
  %s0 = inlined_call_operand.vmem [shape: bf16[36,512], index: 0, kind: input, shape index: {}]
  %s1 = inlined_call_operand.vmem [shape: bf16[8,36], index: 1, kind: input, shape index: {}]
  %s2 = inlined_call_operand.vmem [shape: f32[8,1], index: 2, kind: input, shape index: {}]
  %s3 = inlined_call_operand.vmem [shape: f32[8,32,64], index: 3, kind: input, shape index: {}]
  %s4 = inlined_call_operand.vmem [shape: f32[32,1], index: 4, kind: input, shape index: {}]
  %s5 = inlined_call_operand.vmem [shape: f32[10,32], index: 5, kind: input, shape index: {}]
  %s6 = inlined_call_operand.vmem [shape: f32[10,1], index: 6, kind: input, shape index: {}]
  %s7 = inlined_call_operand.vmem [shape: f32[32,2], index: 7, kind: output, shape index: {0}]
  %s8 = inlined_call_operand.vmem [shape: f32[10,2], index: 8, kind: output, shape index: {1}]
  %9 = xla_tuple %s7, %s8
  %s10 = sld [smem:[#allocation0]]
  $region46: #{base_head_split_forward.1} parent=0
    _
  %s12 = ssub.s32 1, %s10
  %s13 = scalar_select 0, %s12, %s10
  // Predicated region
  $region2: #{base_head_split_forward.1} parent=0 // pred_check
    _
  $region3: #{base_head_split_forward.1} parent=0 // pred_check_branch
    %15 = sbr.rel (0) target = $region5
  $region4: #{base_head_split_forward.1} parent=0 // pred_region
    _
  $region5: #{base_head_split_forward.1} parent=0 // pred_fallthru
    _
  // Predicated region
  $region6: #{base_head_split_forward.1} parent=0 // pred_check
    _
  $region7: #{base_head_split_forward.1} parent=0 // pred_check_branch
    %17 = sbr.rel (0) target = $region9
  $region8: #{base_head_split_forward.1} parent=0 // pred_region
    _
  $region9: #{base_head_split_forward.1} parent=0 // pred_fallthru
    _
  // Predicated region
  $region10: #{base_head_split_forward.1} parent=0 // pred_check
    _
  $region11: #{base_head_split_forward.1} parent=0 // pred_check_branch
    %19 = sbr.rel (0) target = $region13
  $region12: #{base_head_split_forward.1} parent=0 // pred_region
    _
  $region13: #{base_head_split_forward.1} parent=0 // pred_fallthru
    _
  // Predicated region
  $region14: #{base_head_split_forward.1} parent=0 // pred_check
    _
  $region15: #{base_head_split_forward.1} parent=0 // pred_check_branch
    %21 = sbr.rel (0) target = $region17
  $region16: #{base_head_split_forward.1} parent=0 // pred_region
    _
  $region17: #{base_head_split_forward.1} parent=0 // pred_fallthru
    _
  // Predicated region
  $region18: #{base_head_split_forward.1} parent=0 // pred_check
    _
  $region19: #{base_head_split_forward.1} parent=0 // pred_check_branch
    %23 = sbr.rel (0) target = $region21
  $region20: #{base_head_split_forward.1} parent=0 // pred_region
    _
  $region21: #{base_head_split_forward.1} parent=0 // pred_fallthru
    _
  // Predicated region
  $region22: #{base_head_split_forward.1} parent=0 // pred_check
    _
  $region23: #{base_head_split_forward.1} parent=0 // pred_check_branch
    %25 = sbr.rel (0) target = $region25
  $region24: #{base_head_split_forward.1} parent=0 // pred_region
    _
  $region25: #{base_head_split_forward.1} parent=0 // pred_fallthru
    _
  // Predicated region
  $region26: #{base_head_split_forward.1} parent=0 // pred_check
    _
  $region27: #{base_head_split_forward.1} parent=0 // pred_check_branch
    %27 = sbr.rel (0) target = $region29
  $region28: #{base_head_split_forward.1} parent=0 // pred_region
    _
  $region29: #{base_head_split_forward.1} parent=0 // pred_fallthru
    _
  %v29 = vld [vmem:[%s1] sm:$0xf]
  %v30 = vld [vmem:[%s0] sm:$0xff]
  %v31 = vld [vmem:[%s0 + $0x8] sm:$0xff]
  %v32 = vld [vmem:[%s0 + $0x10] sm:$0xff]
  %v33 = vld [vmem:[%s0 + $0x18] sm:$0xff]
  %v34 = vld [vmem:[%s0 + $0x20] sm:$0xff]
  %v35 = vld [vmem:[%s0 + $0x28] sm:$0xff]
  %v36 = vld [vmem:[%s0 + $0x30] sm:$0xff]
  %v37 = vld [vmem:[%s0 + $0x38] sm:$0xff]
  %v38 = vld [vmem:[%s0 + $0x40] sm:$0x33]
  %v39 = vld [vmem:[%s0 + $0x48] sm:$0x33]
  %v40 = vld [vmem:[%s2] sm:$0xff]
  %42 = vset.pattern.permute.xlu0 0
  %43 = vperm.xlu0 %42, %v40
  %v44 = vpop.permute.xlu0 %43
  %v56 = vunpack.c.l.b16 %v30
  %v57 = vunpack.c.h.b16 %v30
  %v58 = vunpack.c.l.b16 %v31
  %v59 = vunpack.c.h.b16 %v31
  %v60 = vunpack.c.l.b16 %v32
  %v61 = vunpack.c.h.b16 %v32
  %v62 = vunpack.c.l.b16 %v33
  %v63 = vunpack.c.h.b16 %v33
  %v64 = vunpack.c.l.b16 %v34
  %v65 = vunpack.c.h.b16 %v34
  %v66 = vunpack.c.l.b16 %v35
  %v67 = vunpack.c.h.b16 %v35
  %v68 = vunpack.c.l.b16 %v36
  %v69 = vunpack.c.h.b16 %v36
  %v70 = vunpack.c.l.b16 %v37
  %v71 = vunpack.c.h.b16 %v37
  %v72 = vunpack.c.l.b16 %v38
  %v73 = vunpack.c.h.b16 %v38
  %v74 = vunpack.c.l.b16 %v39
  %v75 = vunpack.c.h.b16 %v39
  %v76 = vpack.c.b16 %v60, %v56
  %v77 = vpack.c.b16 %v61, %v57
  %v78 = vpack.c.b16 %v62, %v58
  %v79 = vpack.c.b16 %v63, %v59
  %v80 = vpack.c.b16 %v68, %v64
  %v81 = vpack.c.b16 %v69, %v65
  %v82 = vpack.c.b16 %v70, %v66
  %v83 = vpack.c.b16 %v71, %v67
  %v84 = vpack.c.b16 %v72, %v72
  %v85 = vpack.c.b16 %v73, %v73
  %v86 = vpack.c.b16 %v74, %v74
  %v87 = vpack.c.b16 %v75, %v75
  %vm96 = vcmask 293888
  %v98 = vsel %vm96, %v29, 0
  %vm100 = vcmask 1041408
  %v102 = vsel %vm100, %v84, 0
  %v105 = vsel %vm100, %v85, 0
  %v108 = vsel %vm100, %v86, 0
  %v111 = vsel %vm100, %v87, 0
  %113 = vmatprep.subr.bf16.mxu0 %v77
  %114 = vmatpush1.bf16.msra.mxu0 %v76
  %115 = vmatprep.subr.bf16.mxu0 %v81
  %116 = vmatpush1.bf16.msra.mxu0 %v80
  %117 = vmatprep.subr.bf16.mxu0 %v105
  %118 = vmatpush1.bf16.msra.mxu0 %v102
  %119 = vmatprep.subr.bf16.mxu0 0
  %120 = vmatpush1.bf16.msra.mxu0 0
  %121 = vmatprep.subr.bf16.mxu0 0
  %122 = vmatpush1.bf16.msra.mxu0 0
  %123 = vmatprep.subr.bf16.mxu0 0
  %124 = vmatpush1.bf16.msra.mxu0 0
  %125 = vmatprep.subr.bf16.mxu0 0
  %126 = vmatpush1.bf16.msra.mxu0 0
  %127 = vmatprep.subr.bf16.mxu0 0
  %128 = vmatpush1.bf16.msra.mxu0 0
  %129 = vmatprep.subr.bf16.mxu0 0
  %130 = vmatpush1.bf16.msra.mxu0 0
  %131 = vmatprep.subr.bf16.mxu0 0
  %132 = vmatpush1.bf16.msra.mxu0 0
  %133 = vmatprep.subr.bf16.mxu0 0
  %134 = vmatpush1.bf16.msra.mxu0 0
  %135 = vmatprep.subr.bf16.mxu0 0
  %136 = vmatpush1.bf16.msra.mxu0 0
  %137 = vmatprep.subr.bf16.mxu0 0
  %138 = vmatpush1.bf16.msra.mxu0 0
  %139 = vmatprep.subr.bf16.mxu0 0
  %140 = vmatpush1.bf16.msra.mxu0 0
  %141 = vmatprep.subr.bf16.mxu0 0
  %142 = vmatpush1.bf16.msra.mxu0 0
  %143 = vmatprep.subr.bf16.mxu0 0
  %144 = vmatpush1.bf16.msra.mxu0 0
  %145 = vmatprep.mubr.bf16.mxu0 0
  %146 = vmatmul.mubr.bf16.gmra.mrb[0].mxu0 %v98
  %v147 = vpop.f32.mrb[0].mxu0
  %v148 = vadd.f32 %v44, %v147
  %v149 = vpop.f32.mrb[0].mxu0
  %v150 = vadd.f32 %v44, %v149
  %v151 = vpop.f32.mrb[0].mxu0
  %v152 = vpop.f32.mrb[0].mxu0
  %153 = vdwg.mxu0
  %154 = vmatprep.subr.bf16.mxu0 %v79
  %155 = vmatpush1.bf16.msra.mxu0 %v78
  %156 = vmatprep.subr.bf16.mxu0 %v83
  %157 = vmatpush1.bf16.msra.mxu0 %v82
  %158 = vmatprep.subr.bf16.mxu0 %v111
  %159 = vmatpush1.bf16.msra.mxu0 %v108
  %160 = vmatprep.subr.bf16.mxu0 0
  %161 = vmatpush1.bf16.msra.mxu0 0
  %162 = vmatprep.subr.bf16.mxu0 0
  %163 = vmatpush1.bf16.msra.mxu0 0
  %164 = vmatprep.subr.bf16.mxu0 0
  %165 = vmatpush1.bf16.msra.mxu0 0
  %166 = vmatprep.subr.bf16.mxu0 0
  %167 = vmatpush1.bf16.msra.mxu0 0
  %168 = vmatprep.subr.bf16.mxu0 0
  %169 = vmatpush1.bf16.msra.mxu0 0
  %170 = vmatprep.subr.bf16.mxu0 0
  %171 = vmatpush1.bf16.msra.mxu0 0
  %172 = vmatprep.subr.bf16.mxu0 0
  %173 = vmatpush1.bf16.msra.mxu0 0
  %174 = vmatprep.subr.bf16.mxu0 0
  %175 = vmatpush1.bf16.msra.mxu0 0
  %176 = vmatprep.subr.bf16.mxu0 0
  %177 = vmatpush1.bf16.msra.mxu0 0
  %178 = vmatprep.subr.bf16.mxu0 0
  %179 = vmatpush1.bf16.msra.mxu0 0
  %180 = vmatprep.subr.bf16.mxu0 0
  %181 = vmatpush1.bf16.msra.mxu0 0
  %182 = vmatprep.subr.bf16.mxu0 0
  %183 = vmatpush1.bf16.msra.mxu0 0
  %184 = vmatprep.subr.bf16.mxu0 0
  %185 = vmatpush1.bf16.msra.mxu0 0
  %186 = vmatprep.mubr.bf16.mxu0 0
  %187 = vmatmul.mubr.bf16.gmra.mrb[0].mxu0 %v98
  %v188 = vpop.f32.mrb[0].mxu0
  %v189 = vadd.f32 %v44, %v188
  %v190 = vpop.f32.mrb[0].mxu0
  %v191 = vadd.f32 %v44, %v190
  %v192 = vpop.f32.mrb[0].mxu0
  %v193 = vpop.f32.mrb[0].mxu0
  %194 = vdwg.mxu0
  %v195 = vmax.f32 %v148, 0.0
  %v196 = vmax.f32 %v150, 0.0
  %v197 = vmax.f32 %v189, 0.0
  %v198 = vmax.f32 %v191, 0.0
  %v199 = vmax.f32 %v195, %v196
  %v200 = vmax.f32 %v197, %v198
  %v201 = vmax.f32 %v199, %v200
  %v202 = vld [vmem:[%s3] sm:$0xff]
  %v203 = vld [vmem:[%s3 + $0x8] sm:$0xff]
  %v204 = vld [vmem:[%s3 + $0x10] sm:$0xff]
  %v205 = vld [vmem:[%s3 + $0x18] sm:$0xff]
  %v206 = vlaneseq
  %v207 = vshrl.u32 %v206, 7
  %v208 = vsub.s32 0, %v207
  %v209 = vrot.slane %v201, %v208
  %v210 = vmul.f32 %v209, %v202
  %v211 = vmul.f32 %v209, %v203
  %v212 = vmul.f32 %v209, %v204
  %v213 = vmul.f32 %v209, %v205
  %s214 = scalar_lea.vmem %s3, 32
  %v215 = vld [vmem:[%s214] sm:$0xff]
  %v216 = vld [vmem:[%s214 + $0x8] sm:$0xff]
  %v217 = vld [vmem:[%s214 + $0x10] sm:$0xff]
  %v218 = vld [vmem:[%s214 + $0x18] sm:$0xff]
  %v219 = vlaneseq
  %v220 = vshrl.u32 %v219, 7
  %v221 = vsub.s32 1, %v220
  %v222 = vrot.slane %v201, %v221
  %v223 = vmul.f32 %v222, %v215
  %v224 = vmul.f32 %v222, %v216
  %v225 = vmul.f32 %v222, %v217
  %v226 = vmul.f32 %v222, %v218
  %v227 = vadd.f32 %v210, %v223
  %v228 = vadd.f32 %v211, %v224
  %v229 = vadd.f32 %v212, %v225
  %v230 = vadd.f32 %v213, %v226
  %s231 = scalar_lea.vmem %s3, 64
  %v232 = vld [vmem:[%s231] sm:$0xff]
  %v233 = vld [vmem:[%s231 + $0x8] sm:$0xff]
  %v234 = vld [vmem:[%s231 + $0x10] sm:$0xff]
  %v235 = vld [vmem:[%s231 + $0x18] sm:$0xff]
  %v236 = vlaneseq
  %v237 = vshrl.u32 %v236, 7
  %v238 = vsub.s32 2, %v237
  %v239 = vrot.slane %v201, %v238
  %v240 = vmul.f32 %v239, %v232
  %v241 = vmul.f32 %v239, %v233
  %v242 = vmul.f32 %v239, %v234
  %v243 = vmul.f32 %v239, %v235
  %v244 = vadd.f32 %v227, %v240
  %v245 = vadd.f32 %v228, %v241
  %v246 = vadd.f32 %v229, %v242
  %v247 = vadd.f32 %v230, %v243
  %s248 = scalar_lea.vmem %s3, 96
  %v249 = vld [vmem:[%s248] sm:$0xff]
  %v250 = vld [vmem:[%s248 + $0x8] sm:$0xff]
  %v251 = vld [vmem:[%s248 + $0x10] sm:$0xff]
  %v252 = vld [vmem:[%s248 + $0x18] sm:$0xff]
  %v253 = vlaneseq
  %v254 = vshrl.u32 %v253, 7
  %v255 = vsub.s32 3, %v254
  %v256 = vrot.slane %v201, %v255
  %v257 = vmul.f32 %v256, %v249
  %v258 = vmul.f32 %v256, %v250
  %v259 = vmul.f32 %v256, %v251
  %v260 = vmul.f32 %v256, %v252
  %v261 = vadd.f32 %v244, %v257
  %v262 = vadd.f32 %v245, %v258
  %v263 = vadd.f32 %v246, %v259
  %v264 = vadd.f32 %v247, %v260
  %s265 = scalar_lea.vmem %s3, 128
  %v266 = vld [vmem:[%s265] sm:$0xff]
  %v267 = vld [vmem:[%s265 + $0x8] sm:$0xff]
  %v268 = vld [vmem:[%s265 + $0x10] sm:$0xff]
  %v269 = vld [vmem:[%s265 + $0x18] sm:$0xff]
  %v270 = vlaneseq
  %v271 = vshrl.u32 %v270, 7
  %v272 = vsub.s32 4, %v271
  %v273 = vrot.slane %v201, %v272
  %v274 = vmul.f32 %v273, %v266
  %v275 = vmul.f32 %v273, %v267
  %v276 = vmul.f32 %v273, %v268
  %v277 = vmul.f32 %v273, %v269
  %v278 = vadd.f32 %v261, %v274
  %v279 = vadd.f32 %v262, %v275
  %v280 = vadd.f32 %v263, %v276
  %v281 = vadd.f32 %v264, %v277
  %s282 = scalar_lea.vmem %s3, 160
  %v283 = vld [vmem:[%s282] sm:$0xff]
  %v284 = vld [vmem:[%s282 + $0x8] sm:$0xff]
  %v285 = vld [vmem:[%s282 + $0x10] sm:$0xff]
  %v286 = vld [vmem:[%s282 + $0x18] sm:$0xff]
  %v287 = vlaneseq
  %v288 = vshrl.u32 %v287, 7
  %v289 = vsub.s32 5, %v288
  %v290 = vrot.slane %v201, %v289
  %v291 = vmul.f32 %v290, %v283
  %v292 = vmul.f32 %v290, %v284
  %v293 = vmul.f32 %v290, %v285
  %v294 = vmul.f32 %v290, %v286
  %v295 = vadd.f32 %v278, %v291
  %v296 = vadd.f32 %v279, %v292
  %v297 = vadd.f32 %v280, %v293
  %v298 = vadd.f32 %v281, %v294
  %s299 = scalar_lea.vmem %s3, 192
  %v300 = vld [vmem:[%s299] sm:$0xff]
  %v301 = vld [vmem:[%s299 + $0x8] sm:$0xff]
  %v302 = vld [vmem:[%s299 + $0x10] sm:$0xff]
  %v303 = vld [vmem:[%s299 + $0x18] sm:$0xff]
  %v304 = vlaneseq
  %v305 = vshrl.u32 %v304, 7
  %v306 = vsub.s32 6, %v305
  %v307 = vrot.slane %v201, %v306
  %v308 = vmul.f32 %v307, %v300
  %v309 = vmul.f32 %v307, %v301
  %v310 = vmul.f32 %v307, %v302
  %v311 = vmul.f32 %v307, %v303
  %v312 = vadd.f32 %v295, %v308
  %v313 = vadd.f32 %v296, %v309
  %v314 = vadd.f32 %v297, %v310
  %v315 = vadd.f32 %v298, %v311
  %s316 = scalar_lea.vmem %s3, 224
  %v317 = vld [vmem:[%s316] sm:$0xff]
  %v318 = vld [vmem:[%s316 + $0x8] sm:$0xff]
  %v319 = vld [vmem:[%s316 + $0x10] sm:$0xff]
  %v320 = vld [vmem:[%s316 + $0x18] sm:$0xff]
  %v321 = vlaneseq
  %v322 = vshrl.u32 %v321, 7
  %v323 = vsub.s32 7, %v322
  %v324 = vrot.slane %v201, %v323
  %v325 = vmul.f32 %v324, %v317
  %v326 = vmul.f32 %v324, %v318
  %v327 = vmul.f32 %v324, %v319
  %v328 = vmul.f32 %v324, %v320
  %v329 = vadd.f32 %v312, %v325
  %v330 = vadd.f32 %v313, %v326
  %v331 = vadd.f32 %v314, %v327
  %v332 = vadd.f32 %v315, %v328
  %vm333 = vcmask 523264
  %v334 = vsel %vm333, %v329, 0.0
  %335 = vadd.xlane.f32.xlu0 %v334
  %v336 = vpop.xlane.xlu0 %335
  %v337 = vsel %vm333, %v330, 0.0
  %338 = vadd.xlane.f32.xlu0 %v337
  %v339 = vpop.xlane.xlu0 %338
  %v340 = vsel %vm333, %v331, 0.0
  %341 = vadd.xlane.f32.xlu0 %v340
  %v342 = vpop.xlane.xlu0 %341
  %v343 = vsel %vm333, %v332, 0.0
  %344 = vadd.xlane.f32.xlu0 %v343
  %v345 = vpop.xlane.xlu0 %344
  %v346 = vld [vmem:[%s4] sm:$0xff]
  %v347 = vld [vmem:[%s4 + $0x8] sm:$0xff]
  %v348 = vld [vmem:[%s4 + $0x10] sm:$0xff]
  %v349 = vld [vmem:[%s4 + $0x18] sm:$0xff]
  %v350 = vadd.f32 %v336, %v346
  %v351 = vadd.f32 %v339, %v347
  %v352 = vadd.f32 %v342, %v348
  %v353 = vadd.f32 %v345, %v349
  %v354 = vmax.f32 %v350, 0.0
  %v355 = vmax.f32 %v351, 0.0
  %v356 = vmax.f32 %v352, 0.0
  %v357 = vmax.f32 %v353, 0.0
  %vm358 = vcmask 7168
  %359 = vst.msk [vmem:[%s7] sm:$0xff] %vm358, %v354
  %360 = vst.msk [vmem:[%s7 + $0x8] sm:$0xff] %vm358, %v355
  %361 = vst.msk [vmem:[%s7 + $0x10] sm:$0xff] %vm358, %v356
  %362 = vst.msk [vmem:[%s7 + $0x18] sm:$0xff] %vm358, %v357
  %v363 = vld [vmem:[%s3] sm:$0xff]
  %v364 = vld [vmem:[%s3 + $0x8] sm:$0xff]
  %v365 = vld [vmem:[%s3 + $0x10] sm:$0xff]
  %v366 = vld [vmem:[%s3 + $0x18] sm:$0xff]
  %371 = vrot.lane.b32.xlu0 %v363, 64
  %v372 = vpop.permute.xlu0 %371
  %373 = vrot.lane.b32.xlu0 %v364, 64
  %v374 = vpop.permute.xlu0 %373
  %375 = vrot.lane.b32.xlu0 %v365, 64
  %v376 = vpop.permute.xlu0 %375
  %377 = vrot.lane.b32.xlu0 %v366, 64
  %v378 = vpop.permute.xlu0 %377
  %v383 = vmul.f32 %v209, %v372
  %v384 = vmul.f32 %v209, %v374
  %v385 = vmul.f32 %v209, %v376
  %v386 = vmul.f32 %v209, %v378
  %v387 = vld [vmem:[%s214] sm:$0xff]
  %v388 = vld [vmem:[%s214 + $0x8] sm:$0xff]
  %v389 = vld [vmem:[%s214 + $0x10] sm:$0xff]
  %v390 = vld [vmem:[%s214 + $0x18] sm:$0xff]
  %395 = vrot.lane.b32.xlu0 %v387, 64
  %v396 = vpop.permute.xlu0 %395
  %397 = vrot.lane.b32.xlu0 %v388, 64
  %v398 = vpop.permute.xlu0 %397
  %399 = vrot.lane.b32.xlu0 %v389, 64
  %v400 = vpop.permute.xlu0 %399
  %401 = vrot.lane.b32.xlu0 %v390, 64
  %v402 = vpop.permute.xlu0 %401
  %v407 = vmul.f32 %v222, %v396
  %v408 = vmul.f32 %v222, %v398
  %v409 = vmul.f32 %v222, %v400
  %v410 = vmul.f32 %v222, %v402
  %v411 = vadd.f32 %v383, %v407
  %v412 = vadd.f32 %v384, %v408
  %v413 = vadd.f32 %v385, %v409
  %v414 = vadd.f32 %v386, %v410
  %v415 = vld [vmem:[%s231] sm:$0xff]
  %v416 = vld [vmem:[%s231 + $0x8] sm:$0xff]
  %v417 = vld [vmem:[%s231 + $0x10] sm:$0xff]
  %v418 = vld [vmem:[%s231 + $0x18] sm:$0xff]
  %423 = vrot.lane.b32.xlu0 %v415, 64
  %v424 = vpop.permute.xlu0 %423
  %425 = vrot.lane.b32.xlu0 %v416, 64
  %v426 = vpop.permute.xlu0 %425
  %427 = vrot.lane.b32.xlu0 %v417, 64
  %v428 = vpop.permute.xlu0 %427
  %429 = vrot.lane.b32.xlu0 %v418, 64
  %v430 = vpop.permute.xlu0 %429
  %v435 = vmul.f32 %v239, %v424
  %v436 = vmul.f32 %v239, %v426
  %v437 = vmul.f32 %v239, %v428
  %v438 = vmul.f32 %v239, %v430
  %v439 = vadd.f32 %v411, %v435
  %v440 = vadd.f32 %v412, %v436
  %v441 = vadd.f32 %v413, %v437
  %v442 = vadd.f32 %v414, %v438
  %v443 = vld [vmem:[%s248] sm:$0xff]
  %v444 = vld [vmem:[%s248 + $0x8] sm:$0xff]
  %v445 = vld [vmem:[%s248 + $0x10] sm:$0xff]
  %v446 = vld [vmem:[%s248 + $0x18] sm:$0xff]
  %451 = vrot.lane.b32.xlu0 %v443, 64
  %v452 = vpop.permute.xlu0 %451
  %453 = vrot.lane.b32.xlu0 %v444, 64
  %v454 = vpop.permute.xlu0 %453
  %455 = vrot.lane.b32.xlu0 %v445, 64
  %v456 = vpop.permute.xlu0 %455
  %457 = vrot.lane.b32.xlu0 %v446, 64
  %v458 = vpop.permute.xlu0 %457
  %v463 = vmul.f32 %v256, %v452
  %v464 = vmul.f32 %v256, %v454
  %v465 = vmul.f32 %v256, %v456
  %v466 = vmul.f32 %v256, %v458
  %v467 = vadd.f32 %v439, %v463
  %v468 = vadd.f32 %v440, %v464
  %v469 = vadd.f32 %v441, %v465
  %v470 = vadd.f32 %v442, %v466
  %v471 = vld [vmem:[%s265] sm:$0xff]
  %v472 = vld [vmem:[%s265 + $0x8] sm:$0xff]
  %v473 = vld [vmem:[%s265 + $0x10] sm:$0xff]
  %v474 = vld [vmem:[%s265 + $0x18] sm:$0xff]
  %479 = vrot.lane.b32.xlu0 %v471, 64
  %v480 = vpop.permute.xlu0 %479
  %481 = vrot.lane.b32.xlu0 %v472, 64
  %v482 = vpop.permute.xlu0 %481
  %483 = vrot.lane.b32.xlu0 %v473, 64
  %v484 = vpop.permute.xlu0 %483
  %485 = vrot.lane.b32.xlu0 %v474, 64
  %v486 = vpop.permute.xlu0 %485
  %v491 = vmul.f32 %v273, %v480
  %v492 = vmul.f32 %v273, %v482
  %v493 = vmul.f32 %v273, %v484
  %v494 = vmul.f32 %v273, %v486
  %v495 = vadd.f32 %v467, %v491
  %v496 = vadd.f32 %v468, %v492
  %v497 = vadd.f32 %v469, %v493
  %v498 = vadd.f32 %v470, %v494
  %v499 = vld [vmem:[%s282] sm:$0xff]
  %v500 = vld [vmem:[%s282 + $0x8] sm:$0xff]
  %v501 = vld [vmem:[%s282 + $0x10] sm:$0xff]
  %v502 = vld [vmem:[%s282 + $0x18] sm:$0xff]
  %507 = vrot.lane.b32.xlu0 %v499, 64
  %v508 = vpop.permute.xlu0 %507
  %509 = vrot.lane.b32.xlu0 %v500, 64
  %v510 = vpop.permute.xlu0 %509
  %511 = vrot.lane.b32.xlu0 %v501, 64
  %v512 = vpop.permute.xlu0 %511
  %513 = vrot.lane.b32.xlu0 %v502, 64
  %v514 = vpop.permute.xlu0 %513
  %v519 = vmul.f32 %v290, %v508
  %v520 = vmul.f32 %v290, %v510
  %v521 = vmul.f32 %v290, %v512
  %v522 = vmul.f32 %v290, %v514
  %v523 = vadd.f32 %v495, %v519
  %v524 = vadd.f32 %v496, %v520
  %v525 = vadd.f32 %v497, %v521
  %v526 = vadd.f32 %v498, %v522
  %v527 = vld [vmem:[%s299] sm:$0xff]
  %v528 = vld [vmem:[%s299 + $0x8] sm:$0xff]
  %v529 = vld [vmem:[%s299 + $0x10] sm:$0xff]
  %v530 = vld [vmem:[%s299 + $0x18] sm:$0xff]
  %535 = vrot.lane.b32.xlu0 %v527, 64
  %v536 = vpop.permute.xlu0 %535
  %537 = vrot.lane.b32.xlu0 %v528, 64
  %v538 = vpop.permute.xlu0 %537
  %539 = vrot.lane.b32.xlu0 %v529, 64
  %v540 = vpop.permute.xlu0 %539
  %541 = vrot.lane.b32.xlu0 %v530, 64
  %v542 = vpop.permute.xlu0 %541
  %v547 = vmul.f32 %v307, %v536
  %v548 = vmul.f32 %v307, %v538
  %v549 = vmul.f32 %v307, %v540
  %v550 = vmul.f32 %v307, %v542
  %v551 = vadd.f32 %v523, %v547
  %v552 = vadd.f32 %v524, %v548
  %v553 = vadd.f32 %v525, %v549
  %v554 = vadd.f32 %v526, %v550
  %v555 = vld [vmem:[%s316] sm:$0xff]
  %v556 = vld [vmem:[%s316 + $0x8] sm:$0xff]
  %v557 = vld [vmem:[%s316 + $0x10] sm:$0xff]
  %v558 = vld [vmem:[%s316 + $0x18] sm:$0xff]
  %563 = vrot.lane.b32.xlu0 %v555, 64
  %v564 = vpop.permute.xlu0 %563
  %565 = vrot.lane.b32.xlu0 %v556, 64
  %v566 = vpop.permute.xlu0 %565
  %567 = vrot.lane.b32.xlu0 %v557, 64
  %v568 = vpop.permute.xlu0 %567
  %569 = vrot.lane.b32.xlu0 %v558, 64
  %v570 = vpop.permute.xlu0 %569
  %v575 = vmul.f32 %v324, %v564
  %v576 = vmul.f32 %v324, %v566
  %v577 = vmul.f32 %v324, %v568
  %v578 = vmul.f32 %v324, %v570
  %v579 = vadd.f32 %v551, %v575
  %v580 = vadd.f32 %v552, %v576
  %v581 = vadd.f32 %v553, %v577
  %v582 = vadd.f32 %v554, %v578
  %587 = vrot.lane.b32.xlu0 %v579, 64
  %v588 = vpop.permute.xlu0 %587
  %589 = vrot.lane.b32.xlu0 %v580, 64
  %v590 = vpop.permute.xlu0 %589
  %591 = vrot.lane.b32.xlu0 %v581, 64
  %v592 = vpop.permute.xlu0 %591
  %593 = vrot.lane.b32.xlu0 %v582, 64
  %v594 = vpop.permute.xlu0 %593
  %v599 = vsel %vm333, %v588, 0.0
  %600 = vadd.xlane.f32.xlu0 %v599
  %v601 = vpop.xlane.xlu0 %600
  %v602 = vsel %vm333, %v590, 0.0
  %603 = vadd.xlane.f32.xlu0 %v602
  %v604 = vpop.xlane.xlu0 %603
  %v605 = vsel %vm333, %v592, 0.0
  %606 = vadd.xlane.f32.xlu0 %v605
  %v607 = vpop.xlane.xlu0 %606
  %v608 = vsel %vm333, %v594, 0.0
  %609 = vadd.xlane.f32.xlu0 %v608
  %v610 = vpop.xlane.xlu0 %609
  %v611 = vld [vmem:[%s4] sm:$0xff]
  %v612 = vld [vmem:[%s4 + $0x8] sm:$0xff]
  %v613 = vld [vmem:[%s4 + $0x10] sm:$0xff]
  %v614 = vld [vmem:[%s4 + $0x18] sm:$0xff]
  %v615 = vadd.f32 %v601, %v611
  %v616 = vadd.f32 %v604, %v612
  %v617 = vadd.f32 %v607, %v613
  %v618 = vadd.f32 %v610, %v614
  %v619 = vmax.f32 %v615, 0.0
  %v620 = vmax.f32 %v616, 0.0
  %v621 = vmax.f32 %v617, 0.0
  %v622 = vmax.f32 %v618, 0.0
  %627 = vrot.lane.b32.xlu0 %v619, 1
  %v628 = vpop.permute.xlu0 %627
  %629 = vrot.lane.b32.xlu0 %v620, 1
  %v630 = vpop.permute.xlu0 %629
  %631 = vrot.lane.b32.xlu0 %v621, 1
  %v632 = vpop.permute.xlu0 %631
  %633 = vrot.lane.b32.xlu0 %v622, 1
  %v634 = vpop.permute.xlu0 %633
  %vm639 = vcmask 15368
  %640 = vst.msk [vmem:[%s7] sm:$0xff] %vm639, %v628
  %641 = vst.msk [vmem:[%s7 + $0x8] sm:$0xff] %vm639, %v630
  %642 = vst.msk [vmem:[%s7 + $0x10] sm:$0xff] %vm639, %v632
  %643 = vst.msk [vmem:[%s7 + $0x18] sm:$0xff] %vm639, %v634
  %v644 = vld [vmem:[%s5] sm:$0xff]
  %v645 = vld [vmem:[%s5 + $0x8] sm:$0x3]
  %v646 = vld [vmem:[%s7] sm:$0xff]
  %v647 = vld [vmem:[%s7 + $0x8] sm:$0xff]
  %v648 = vld [vmem:[%s7 + $0x10] sm:$0xff]
  %v649 = vld [vmem:[%s7 + $0x18] sm:$0xff]
  %v650 = vld [vmem:[%s6] sm:$0xff]
  %v651 = vld [vmem:[%s6 + $0x8] sm:$0x3]
  %653 = vset.pattern.permute.xlu0 0
  %654 = vperm.xlu0 %653, %v650
  %v655 = vpop.permute.xlu0 %654
  %658 = vset.pattern.permute.xlu0 0
  %659 = vperm.xlu0 %658, %v651
  %v660 = vpop.permute.xlu0 %659
  %vm662 = vcmask 261120
  %v664 = vsel %vm662, %v644, 0
  %v667 = vsel %vm662, %v645, 0
  %669 = vmatprep.subr.mxu0 0.0
  %670 = vmatpush1.msra.mxu0 %v646
  %671 = vmatprep.subr.mxu0 0.0
  %672 = vmatpush1.msra.mxu0 %v647
  %673 = vmatprep.subr.mxu0 0.0
  %674 = vmatpush1.msra.mxu0 %v648
  %675 = vmatprep.subr.mxu0 0.0
  %676 = vmatpush1.msra.mxu0 %v649
  %677 = vmatprep.subr.mxu0 0.0
  %678 = vmatpush1.msra.mxu0 0.0
  %679 = vmatprep.subr.mxu0 0.0
  %680 = vmatpush1.msra.mxu0 0.0
  %681 = vmatprep.subr.mxu0 0.0
  %682 = vmatpush1.msra.mxu0 0.0
  %683 = vmatprep.subr.mxu0 0.0
  %684 = vmatpush1.msra.mxu0 0.0
  %685 = vmatprep.subr.mxu0 0.0
  %686 = vmatpush1.msra.mxu0 0.0
  %687 = vmatprep.subr.mxu0 0.0
  %688 = vmatpush1.msra.mxu0 0.0
  %689 = vmatprep.subr.mxu0 0.0
  %690 = vmatpush1.msra.mxu0 0.0
  %691 = vmatprep.subr.mxu0 0.0
  %692 = vmatpush1.msra.mxu0 0.0
  %693 = vmatprep.subr.mxu0 0.0
  %694 = vmatpush1.msra.mxu0 0.0
  %695 = vmatprep.subr.mxu0 0.0
  %696 = vmatpush1.msra.mxu0 0.0
  %697 = vmatprep.subr.mxu0 0.0
  %698 = vmatpush1.msra.mxu0 0.0
  %699 = vmatprep.subr.mxu0 0.0
  %700 = vmatpush1.msra.mxu0 0.0
  %701 = vmatprep.subr.mxu0 0.0
  %702 = vmatpush1.msra.mxu0 0.0
  %703 = vmatprep.subr.mxu0 0.0
  %704 = vmatpush1.msra.mxu0 0.0
  %705 = vmatprep.subr.mxu0 0.0
  %706 = vmatpush1.msra.mxu0 0.0
  %707 = vmatprep.subr.mxu0 0.0
  %708 = vmatpush1.msra.mxu0 0.0
  %709 = vmatprep.subr.mxu0 0.0
  %710 = vmatpush1.msra.mxu0 0.0
  %711 = vmatprep.subr.mxu0 0.0
  %712 = vmatpush1.msra.mxu0 0.0
  %713 = vmatprep.subr.mxu0 0.0
  %714 = vmatpush1.msra.mxu0 0.0
  %715 = vmatprep.subr.mxu0 0.0
  %716 = vmatpush1.msra.mxu0 0.0
  %717 = vmatprep.subr.mxu0 0.0
  %718 = vmatpush1.msra.mxu0 0.0
  %719 = vmatprep.subr.mxu0 0.0
  %720 = vmatpush1.msra.mxu0 0.0
  %721 = vmatprep.subr.mxu0 0.0
  %722 = vmatpush1.msra.mxu0 0.0
  %723 = vmatprep.subr.mxu0 0.0
  %724 = vmatpush1.msra.mxu0 0.0
  %725 = vmatprep.subr.mxu0 0.0
  %726 = vmatpush1.msra.mxu0 0.0
  %727 = vmatprep.subr.mxu0 0.0
  %728 = vmatpush1.msra.mxu0 0.0
  %729 = vmatprep.subr.mxu0 0.0
  %730 = vmatpush1.msra.mxu0 0.0
  %731 = vmatprep.subr.mxu0 0.0
  %732 = vmatpush1.msra.mxu0 0.0
  %733 = vmatprep.mubr.f32.mxu0 0.0
  %734 = vmatmul.mubr.f32.gmra.mrb[0].mxu0 %v664
  %v735 = vpop.f32.mrb[0].mxu0
  %v736 = vadd.f32 %v655, %v735
  %v737 = vpop.f32.mrb[0].mxu0
  %738 = vmatprep.mubr.f32.mxu0 0.0
  %739 = vmatmul.mubr.f32.gmra.mrb[0].mxu0 %v667
  %v740 = vpop.f32.mrb[0].mxu0
  %v741 = vadd.f32 %v660, %v740
  %v742 = vpop.f32.mrb[0].mxu0
  %743 = vdwg.mxu0
  %vm744 = vcmask 15360
  %745 = vst.msk [vmem:[%s8] sm:$0xff] %vm744, %v736
  %vm746 = vcmask 9216
  %747 = vst.msk [vmem:[%s8 + $0x8] sm:$0x3] %vm746, %v741
  // Predicated region
  $region30: #{base_head_split_forward.1} parent=0 // pred_check
    _
  $region31: #{base_head_split_forward.1} parent=0 // pred_check_branch
    %749 = sbr.rel (0) target = $region33
  $region32: #{base_head_split_forward.1} parent=0 // pred_region
    _
  $region33: #{base_head_split_forward.1} parent=0 // pred_fallthru
    _
  // Predicated region
  $region34: #{base_head_split_forward.1} parent=0 // pred_check
    _
  $region35: #{base_head_split_forward.1} parent=0 // pred_check_branch
    %751 = sbr.rel (0) target = $region37
  $region36: #{base_head_split_forward.1} parent=0 // pred_region
    _
  $region37: #{base_head_split_forward.1} parent=0 // pred_fallthru
    _
  // Predicated region
  $region38: #{base_head_split_forward.1} parent=0 // pred_check
    _
  $region39: #{base_head_split_forward.1} parent=0 // pred_check_branch
    %753 = sbr.rel (0) target = $region41
  $region40: #{base_head_split_forward.1} parent=0 // pred_region
    _
  $region41: #{base_head_split_forward.1} parent=0 // pred_fallthru
    _
  // Predicated region
  $region42: #{base_head_split_forward.1} parent=0 // pred_check
    _
  $region43: #{base_head_split_forward.1} parent=0 // pred_check_branch
    %755 = sbr.rel (0) target = $region45
  $region44: #{base_head_split_forward.1} parent=0 // pred_region
    _
  $region45: #{base_head_split_forward.1} parent=0 // pred_fallthru
    _

</llo_original>
